<compile_context>
chip_gen: v6e
topology: v6e:2x2x1
jax: 0.10.0
libtpu: 0.0.40
codegen_flags: <defaults>
</compile_context>

<pallas_src>
import functools

import jax
import jax.numpy as jnp
from jax.experimental import pallas as pl
from jax.experimental.pallas import tpu as pltpu

HIDDEN = 64        # logical hidden size (matches nn.Linear(..., 64))
HIDDEN_PAD = 128   # padded to native 128-lane vreg width


def actor_kernel(s_ref, w1_ref, b1_ref, w2_ref, b2_ref, w3_ref, b3_ref,
                 out_ref, *, a_max):
    # layer 1: relu(s @ W1 + b1)            -> (tile_b, 128)
    x = (jnp.dot(s_ref[...], w1_ref[...], preferred_element_type=jnp.float32)
         + b1_ref[...])
    x = jnp.maximum(x, 0.0)
    # layer 2: relu(x @ W2 + b2)            -> (tile_b, 128)
    x = (jnp.dot(x, w2_ref[...], preferred_element_type=jnp.float32)
         + b2_ref[...])
    x = jnp.maximum(x, 0.0)
    # layer 3: tanh(x @ W3 + b3) * a_max    -> (tile_b, a_dim)
    y = (jnp.dot(x, w3_ref[...], preferred_element_type=jnp.float32)
         + b3_ref[...])
    out_ref[...] = jnp.tanh(y) * a_max


def actor_forward(s, padded_params, a_max, *, tile_b=None):
    B, s_dim = s.shape
    w1 = padded_params["l1_w"]; b1 = padded_params["l1_b"]
    w2 = padded_params["l2_w"]; b2 = padded_params["l2_b"]
    w3 = padded_params["l3_w"]; b3 = padded_params["l3_b"]
    H = w1.shape[1]
    a_dim = w3.shape[1]

    # Batch tiling: one resident weight set, batch tiles streamed over a
    # "parallel" grid axis (megacore sharding on v7x at large batch).
    if tile_b is None:
        tile_b = B if B <= 256 else 256
    n_tiles = pl.cdiv(B, tile_b)
    B_pad = n_tiles * tile_b
    s_in = s if B_pad == B else jnp.pad(s, ((0, B_pad - B), (0, 0)))

    kernel = functools.partial(actor_kernel, a_max=float(a_max))

    flops = 2 * B_pad * (s_dim * H + H * H + H * a_dim)
    bytes_accessed = 4 * (B_pad * s_dim + B_pad * a_dim
                          + s_dim * H + H + H * H + H + H * a_dim + a_dim)

    out = pl.pallas_call(
        kernel,
        out_shape=jax.ShapeDtypeStruct((B_pad, a_dim), jnp.float32),
        grid=(n_tiles,),
        in_specs=[
            pl.BlockSpec((tile_b, s_dim), lambda i: (i, 0)),   # batch-tiled
            pl.BlockSpec(w1.shape, lambda i: (0, 0)),          # weights resident
            pl.BlockSpec(b1.shape, lambda i: (0, 0)),
            pl.BlockSpec(w2.shape, lambda i: (0, 0)),
            pl.BlockSpec(b2.shape, lambda i: (0, 0)),
            pl.BlockSpec(w3.shape, lambda i: (0, 0)),
            pl.BlockSpec(b3.shape, lambda i: (0, 0)),
        ],
        out_specs=pl.BlockSpec((tile_b, a_dim), lambda i: (i, 0)),
        compiler_params=pltpu.CompilerParams(
            dimension_semantics=("parallel",)),
        cost_estimate=pl.CostEstimate(
            flops=flops,
            transcendentals=B_pad * a_dim,
            bytes_accessed=bytes_accessed),
    )(s_in, w1, b1, w2, b2, w3, b3)

    return out[:B] if B_pad != B else out


def init_params(key, s_dim, a_dim, hidden=HIDDEN):
    """nn.Linear-style init; weights stored as (in, out)."""
    ks = jax.random.split(key, 6)
    lim1 = 1.0 / jnp.sqrt(s_dim)
    l1_w = jax.random.uniform(ks[0], (s_dim, hidden), jnp.float32, -lim1, lim1)
    l1_b = jax.random.uniform(ks[1], (1, hidden), jnp.float32, -lim1, lim1)
    lim2 = 1.0 / jnp.sqrt(hidden)
    l2_w = jax.random.uniform(ks[2], (hidden, hidden), jnp.float32, -lim2, lim2)
    l2_b = jax.random.uniform(ks[3], (1, hidden), jnp.float32, -lim2, lim2)
    l3_w = jax.random.uniform(ks[4], (hidden, a_dim), jnp.float32, -lim2, lim2)
    l3_b = jax.random.uniform(ks[5], (1, a_dim), jnp.float32, -lim2, lim2)
    return dict(l1_w=l1_w, l1_b=l1_b, l2_w=l2_w, l2_b=l2_b,
                l3_w=l3_w, l3_b=l3_b)


def pad_params(p, hidden_pad=HIDDEN_PAD):
    """Zero-pad hidden 64 -> 128 once at init. Exact: padded hidden units stay 0
    through relu, and their l3 rows are 0, so outputs are unchanged."""
    h = p["l1_w"].shape[1]
    d = hidden_pad - h
    return dict(
        l1_w=jnp.pad(p["l1_w"], ((0, 0), (0, d))),
        l1_b=jnp.pad(p["l1_b"], ((0, 0), (0, d))),
        l2_w=jnp.pad(p["l2_w"], ((0, d), (0, d))),
        l2_b=jnp.pad(p["l2_b"], ((0, 0), (0, d))),
        l3_w=jnp.pad(p["l3_w"], ((0, d), (0, 0))),
        l3_b=p["l3_b"],
    )


def actor_ref(s, p, a_max):
    x = jnp.maximum(s @ p["l1_w"] + p["l1_b"], 0.0)
    x = jnp.maximum(x @ p["l2_w"] + p["l2_b"], 0.0)
    return jnp.tanh(x @ p["l3_w"] + p["l3_b"]) * a_max


if __name__ == "__main__":
    key = jax.random.PRNGKey(0)
    k_s, k_p = jax.random.split(key, 2)

    B, S_DIM, A_DIM, A_MAX = 8, 16, 8, 2.0
    s = jax.random.normal(k_s, (B, S_DIM), jnp.float32)
    params = init_params(k_p, S_DIM, A_DIM)
    padded = pad_params(params)  # one-time layout prep (not per forward call)

    a = actor_forward(s, padded, A_MAX)
    a = jax.block_until_ready(a)

    a_ref = actor_ref(s, params, A_MAX)
    assert a.shape == (B, A_DIM), a.shape
    assert jnp.allclose(a, a_ref, atol=1e-5, rtol=1e-5), (a, a_ref)

    print("KERNEL_OK")
</pallas_src>

<mosaic_0001>
module attributes {stable_mosaic.version = 11 : i64} {
  func.func @actor_kernel(%arg0: i32, %arg1: memref<8x16xf32, #tpu.memory_space<vmem>>, %arg2: memref<16x128xf32, #tpu.memory_space<vmem>>, %arg3: memref<1x128xf32, #tpu.memory_space<vmem>>, %arg4: memref<128x128xf32, #tpu.memory_space<vmem>>, %arg5: memref<1x128xf32, #tpu.memory_space<vmem>>, %arg6: memref<128x8xf32, #tpu.memory_space<vmem>>, %arg7: memref<1x8xf32, #tpu.memory_space<vmem>>, %arg8: memref<8x8xf32, #tpu.memory_space<vmem>>) attributes {dimension_semantics = [#tpu.dimension_semantics<parallel>], iteration_bounds = array<i64: 1>, scalar_prefetch = 0 : i64, scratch_operands = 0 : i64, tpu.core_type = #tpu.core_type<tc>, window_params = [{transform_indices = @transform_0, window_bounds = array<i64: 8, 16>}, {pipeline_mode = #tpu.pipeline_mode<synchronous>, transform_indices = @transform_1, window_bounds = array<i64: 16, 128>}, {pipeline_mode = #tpu.pipeline_mode<synchronous>, transform_indices = @transform_2, window_bounds = array<i64: 1, 128>}, {pipeline_mode = #tpu.pipeline_mode<synchronous>, transform_indices = @transform_3, window_bounds = array<i64: 128, 128>}, {pipeline_mode = #tpu.pipeline_mode<synchronous>, transform_indices = @transform_4, window_bounds = array<i64: 1, 128>}, {pipeline_mode = #tpu.pipeline_mode<synchronous>, transform_indices = @transform_5, window_bounds = array<i64: 128, 8>}, {pipeline_mode = #tpu.pipeline_mode<synchronous>, transform_indices = @transform_6, window_bounds = array<i64: 1, 8>}, {transform_indices = @transform_7, window_bounds = array<i64: 8, 8>}]} {
    %c0 = arith.constant 0 : index
    %c0_0 = arith.constant 0 : index
    %0 = vector.load %arg1[%c0, %c0_0] : memref<8x16xf32, #tpu.memory_space<vmem>>, vector<8x16xf32>
    %c0_1 = arith.constant 0 : index
    %c0_2 = arith.constant 0 : index
    %1 = vector.load %arg2[%c0_1, %c0_2] : memref<16x128xf32, #tpu.memory_space<vmem>>, vector<16x128xf32>
    %cst = arith.constant dense<0.000000e+00> : vector<8x128xf32>
    %2 = tpu.matmul %0, %1, %cst {dimension_numbers = #tpu.dot_dimension_numbers<[1], [0], [0], [1], [0, 0, 1, 1], [], []>} : vector<8x16xf32>, vector<16x128xf32>, vector<8x128xf32> -> vector<8x128xf32>
    %c0_3 = arith.constant 0 : index
    %c0_4 = arith.constant 0 : index
    %3 = vector.load %arg3[%c0_3, %c0_4] : memref<1x128xf32, #tpu.memory_space<vmem>>, vector<1x128xf32>
    %4 = vector.broadcast %3 : vector<1x128xf32> to vector<8x128xf32>
    %5 = arith.addf %2, %4 : vector<8x128xf32>
    %cst_5 = arith.constant 0.000000e+00 : f32
    %6 = vector.broadcast %cst_5 : f32 to vector<8x128xf32>
    %7 = arith.maximumf %5, %6 : vector<8x128xf32>
    %c0_6 = arith.constant 0 : index
    %c0_7 = arith.constant 0 : index
    %8 = vector.load %arg4[%c0_6, %c0_7] : memref<128x128xf32, #tpu.memory_space<vmem>>, vector<128x128xf32>
    %cst_8 = arith.constant dense<0.000000e+00> : vector<8x128xf32>
    %9 = tpu.matmul %7, %8, %cst_8 {dimension_numbers = #tpu.dot_dimension_numbers<[1], [0], [0], [1], [0, 0, 1, 1], [], []>} : vector<8x128xf32>, vector<128x128xf32>, vector<8x128xf32> -> vector<8x128xf32>
    %c0_9 = arith.constant 0 : index
    %c0_10 = arith.constant 0 : index
    %10 = vector.load %arg5[%c0_9, %c0_10] : memref<1x128xf32, #tpu.memory_space<vmem>>, vector<1x128xf32>
    %11 = vector.broadcast %10 : vector<1x128xf32> to vector<8x128xf32>
    %12 = arith.addf %9, %11 : vector<8x128xf32>
    %cst_11 = arith.constant 0.000000e+00 : f32
    %13 = vector.broadcast %cst_11 : f32 to vector<8x128xf32>
    %14 = arith.maximumf %12, %13 : vector<8x128xf32>
    %c0_12 = arith.constant 0 : index
    %c0_13 = arith.constant 0 : index
    %15 = vector.load %arg6[%c0_12, %c0_13] : memref<128x8xf32, #tpu.memory_space<vmem>>, vector<128x8xf32>
    %cst_14 = arith.constant dense<0.000000e+00> : vector<8x8xf32>
    %16 = tpu.matmul %14, %15, %cst_14 {dimension_numbers = #tpu.dot_dimension_numbers<[1], [0], [0], [1], [0, 0, 1, 1], [], []>} : vector<8x128xf32>, vector<128x8xf32>, vector<8x8xf32> -> vector<8x8xf32>
    %c0_15 = arith.constant 0 : index
    %c0_16 = arith.constant 0 : index
    %17 = vector.load %arg7[%c0_15, %c0_16] : memref<1x8xf32, #tpu.memory_space<vmem>>, vector<1x8xf32>
    %18 = vector.broadcast %17 : vector<1x8xf32> to vector<8x8xf32>
    %19 = arith.addf %16, %18 : vector<8x8xf32>
    %20 = math.tanh %19 : vector<8x8xf32>
    %cst_17 = arith.constant 2.000000e+00 : f32
    %21 = vector.broadcast %cst_17 : f32 to vector<8x8xf32>
    %22 = arith.mulf %20, %21 : vector<8x8xf32>
    %c0_18 = arith.constant 0 : index
    %c0_19 = arith.constant 0 : index
    %23 = vector.load %arg8[%c0_18, %c0_19] : memref<8x8xf32, #tpu.memory_space<vmem>>, vector<8x8xf32>
    tpu.vector_store %arg8[%c0_18, %c0_19], %22 {strides = array<i32>} : memref<8x8xf32, #tpu.memory_space<vmem>>, vector<8x8xf32>,
    return
  }
  func.func @transform_0(%arg0: i32) -> (i32, i32) {
    %c0_i32 = arith.constant 0 : i32
    %c0_i32_0 = arith.constant 0 : i32
    return %arg0, %c0_i32 : i32, i32
  }
  func.func @transform_1(%arg0: i32) -> (i32, i32) {
    %c0_i32 = arith.constant 0 : i32
    %c0_i32_0 = arith.constant 0 : i32
    %c0_i32_1 = arith.constant 0 : i32
    return %c0_i32, %c0_i32_0 : i32, i32
  }
  func.func @transform_2(%arg0: i32) -> (i32, i32) {
    %c0_i32 = arith.constant 0 : i32
    %c0_i32_0 = arith.constant 0 : i32
    %c0_i32_1 = arith.constant 0 : i32
    return %c0_i32, %c0_i32_0 : i32, i32
  }
  func.func @transform_3(%arg0: i32) -> (i32, i32) {
    %c0_i32 = arith.constant 0 : i32
    %c0_i32_0 = arith.constant 0 : i32
    %c0_i32_1 = arith.constant 0 : i32
    return %c0_i32, %c0_i32_0 : i32, i32
  }
  func.func @transform_4(%arg0: i32) -> (i32, i32) {
    %c0_i32 = arith.constant 0 : i32
    %c0_i32_0 = arith.constant 0 : i32
    %c0_i32_1 = arith.constant 0 : i32
    return %c0_i32, %c0_i32_0 : i32, i32
  }
  func.func @transform_5(%arg0: i32) -> (i32, i32) {
    %c0_i32 = arith.constant 0 : i32
    %c0_i32_0 = arith.constant 0 : i32
    %c0_i32_1 = arith.constant 0 : i32
    return %c0_i32, %c0_i32_0 : i32, i32
  }
  func.func @transform_6(%arg0: i32) -> (i32, i32) {
    %c0_i32 = arith.constant 0 : i32
    %c0_i32_0 = arith.constant 0 : i32
    %c0_i32_1 = arith.constant 0 : i32
    return %c0_i32, %c0_i32_0 : i32, i32
  }
  func.func @transform_7(%arg0: i32) -> (i32, i32) {
    %c0_i32 = arith.constant 0 : i32
    %c0_i32_0 = arith.constant 0 : i32
    return %arg0, %c0_i32 : i32, i32
  }
}

</mosaic_0001>

<llo_original>
// kernel: tpu_custom_call.1
$region0: #{tpu_custom_call.1}
  #allocation0 [shape = 'u32[]', space=smem, size = 0x4, offset = 0x4, fixed_abs, tag = 'smem constant byte address 0x4 - core index']
  #allocation1 [shape = 'u32[144,128]{1,0:T(1,128)}', space=vmem, size = 0x12000, scoped, tag = 'internal scratch']
  %s0 = inlined_call_operand.vmem [shape: f32[8,16], index: 0, kind: input, shape index: {}]
  %s1 = inlined_call_operand.hbm [shape: f32[16,128], index: 1, kind: input, shape index: {}]
  %s2 = inlined_call_operand.vmem [shape: f32[1,128], index: 2, kind: input, shape index: {}]
  %s3 = inlined_call_operand.vmem [shape: f32[128,128], index: 3, kind: input, shape index: {}]
  %s4 = inlined_call_operand.hbm [shape: f32[1,128], index: 4, kind: input, shape index: {}]
  %s5 = inlined_call_operand.vmem [shape: f32[128,8], index: 5, kind: input, shape index: {}]
  %s6 = inlined_call_operand.vmem [shape: f32[1,8], index: 6, kind: input, shape index: {}]
  %s7 = inlined_call_operand.hbm [shape: f32[8,8], index: 7, kind: output, shape index: {}]
  %s8 = sld [smem:[#allocation0]]
  $region46: #{tpu_custom_call.1} parent=0
    _
  %s10 = ssub.s32 1, %s8
  %s11 = scalar_select 0, %s10, %s8
  $region1: #{tpu_custom_call.1} parent=0
    #allocation2 [shape = 'u8[8192]{0}', space=vmem, size = 0x2000, scoped, tag = 'input window, operand 1, single buffered']
    #allocation3 [shape = 's32[1]{0}', space=sflag, size = 0x4, scoped, tag = 'scoped memory for tpu_custom_call.1']
    #allocation4 [shape = 's32[1]{0}', space=sflag, size = 0x4, scoped, tag = 'scoped memory for tpu_custom_call.1']
    #allocation5 [shape = 'u8[512]{0}', space=vmem, size = 0x400, scoped, tag = 'input window, operand 4, single buffered']
    #allocation6 [shape = 's32[1]{0}', space=sflag, size = 0x4, scoped, tag = 'scoped memory for tpu_custom_call.1']
    #allocation7 [shape = 'u8[4096]{0}', space=vmem, size = 0x1000, scoped, tag = 'output window, operand 0, single buffered']
    %12 = vsyncpa [#allocation3], 0
    %13 = vsyncpa [#allocation6], 0
    %14 = vsyncpa [#allocation4], 0
    // Predicated region
    $region2: #{tpu_custom_call.1} parent=1 // pred_check
      _
    $region3: #{tpu_custom_call.1} parent=1 // pred_check_branch
      %16 = sbr.rel (0) target = $region5
    $region4: #{tpu_custom_call.1} parent=1 // pred_region
      _
    $region5: #{tpu_custom_call.1} parent=1 // pred_fallthru
      _
    // Predicated region
    $region6: #{tpu_custom_call.1} parent=1 // pred_check
      _
    $region7: #{tpu_custom_call.1} parent=1 // pred_check_branch
      %18 = sbr.rel (0) target = $region9
    $region8: #{tpu_custom_call.1} parent=1 // pred_region
      %s20 = ssub.s32 256, 256
      %21 = vsyncadd [#allocation3], %s20
      %s22 = sshll.u32 [#allocation2], 4
      %s23 = int_to_ptr.vmem [resolvable:$true] %s22
      %28 = dma.hbm_to_vmem [thread:$0]  %s1, 256, %s23, [#allocation3], 128, 128, 8
    $region9: #{tpu_custom_call.1} parent=1 // pred_fallthru
      _
    // Predicated region
    $region10: #{tpu_custom_call.1} parent=1 // pred_check
      _
    $region11: #{tpu_custom_call.1} parent=1 // pred_check_branch
      %30 = sbr.rel (0) target = $region13
    $region12: #{tpu_custom_call.1} parent=1 // pred_region
      _
    $region13: #{tpu_custom_call.1} parent=1 // pred_fallthru
      _
    // Predicated region
    $region14: #{tpu_custom_call.1} parent=1 // pred_check
      _
    $region15: #{tpu_custom_call.1} parent=1 // pred_check_branch
      %32 = sbr.rel (0) target = $region17
    $region16: #{tpu_custom_call.1} parent=1 // pred_region
      _
    $region17: #{tpu_custom_call.1} parent=1 // pred_fallthru
      _
    // Predicated region
    $region18: #{tpu_custom_call.1} parent=1 // pred_check
      _
    $region19: #{tpu_custom_call.1} parent=1 // pred_check_branch
      %34 = sbr.rel (0) target = $region21
    $region20: #{tpu_custom_call.1} parent=1 // pred_region
      %s36 = ssub.s32 16, 16
      %37 = vsyncadd [#allocation6], %s36
      %s39 = sshll.u32 [#allocation5], 4
      %s40 = int_to_ptr.vmem [resolvable:$true] %s39
      %42 = dma.hbm_to_vmem [thread:$0]  %s4, 16, %s40, [#allocation6]
    $region21: #{tpu_custom_call.1} parent=1 // pred_fallthru
      _
    // Predicated region
    $region22: #{tpu_custom_call.1} parent=1 // pred_check
      _
    $region23: #{tpu_custom_call.1} parent=1 // pred_check_branch
      %44 = sbr.rel (0) target = $region25
    $region24: #{tpu_custom_call.1} parent=1 // pred_region
      _
    $region25: #{tpu_custom_call.1} parent=1 // pred_fallthru
      _
    // Predicated region
    $region26: #{tpu_custom_call.1} parent=1 // pred_check
      _
    $region27: #{tpu_custom_call.1} parent=1 // pred_check_branch
      %46 = sbr.rel (0) target = $region29
    $region28: #{tpu_custom_call.1} parent=1 // pred_region
      _
    $region29: #{tpu_custom_call.1} parent=1 // pred_fallthru
      _
    // Predicated region
    $region30: #{tpu_custom_call.1} parent=1 // pred_check
      _
    $region31: #{tpu_custom_call.1} parent=1 // pred_check_branch
      %48 = sbr.rel (0) target = $region33
    $region32: #{tpu_custom_call.1} parent=1 // pred_region
      %49 = dma.done [#allocation3], 256
    $region33: #{tpu_custom_call.1} parent=1 // pred_fallthru
      _
    // Predicated region
    $region34: #{tpu_custom_call.1} parent=1 // pred_check
      _
    $region35: #{tpu_custom_call.1} parent=1 // pred_check_branch
      %51 = sbr.rel (0) target = $region37
    $region36: #{tpu_custom_call.1} parent=1 // pred_region
      %52 = dma.done [#allocation6], 16
    $region37: #{tpu_custom_call.1} parent=1 // pred_fallthru
      _
    %v53 = vld [vmem:[%s0] sm:$0xff]
    %v54 = vld [vmem:[#allocation2] sm:$0xff]
    %v55 = vld [vmem:[#allocation2 + $0x8] sm:$0xff]
    %v56 = vld [vmem:[%s2] sm:$0x1]
    %v58 = vlaneseq
    %v59 = vshrl.u32 %v58, 7
    %v60 = vsub.s32 0, %v59
    %v61 = vrot.slane %v56, %v60
    %vm63 = vcmask 130048
    %v65 = vsel %vm63, %v53, 0
    %67 = vmatprep.subr.mxu0 0.0
    %68 = vmatpush1.msra.mxu0 0.0
    %69 = vmatprep.subr.mxu0 0.0
    %70 = vmatpush1.msra.mxu0 0.0
    %71 = vmatprep.subr.mxu0 0.0
    %72 = vmatpush1.msra.mxu0 0.0
    %73 = vmatprep.subr.mxu0 0.0
    %74 = vmatpush1.msra.mxu0 0.0
    %75 = vmatprep.subr.mxu0 0.0
    %76 = vmatpush1.msra.mxu0 0.0
    %77 = vmatprep.subr.mxu0 0.0
    %78 = vmatpush1.msra.mxu0 0.0
    %79 = vmatprep.subr.mxu0 0.0
    %80 = vmatpush1.msra.mxu0 0.0
    %81 = vmatprep.subr.mxu0 0.0
    %82 = vmatpush1.msra.mxu0 0.0
    %83 = vmatprep.subr.mxu0 0.0
    %84 = vmatpush1.msra.mxu0 0.0
    %85 = vmatprep.subr.mxu0 0.0
    %86 = vmatpush1.msra.mxu0 0.0
    %87 = vmatprep.subr.mxu0 0.0
    %88 = vmatpush1.msra.mxu0 0.0
    %89 = vmatprep.subr.mxu0 0.0
    %90 = vmatpush1.msra.mxu0 0.0
    %91 = vmatprep.subr.mxu0 0.0
    %92 = vmatpush1.msra.mxu0 0.0
    %93 = vmatprep.subr.mxu0 0.0
    %94 = vmatpush1.msra.mxu0 0.0
    %95 = vmatprep.subr.mxu0 0.0
    %96 = vmatpush1.msra.mxu0 %v55
    %97 = vmatprep.subr.mxu0 0.0
    %98 = vmatpush1.msra.mxu0 %v54
    %99 = vmatprep.subr.mxu0 0.0
    %100 = vmatpush2.msra.mxu0 0.0
    %101 = vmatprep.subr.mxu0 0.0
    %102 = vmatpush2.msra.mxu0 0.0
    %103 = vmatprep.subr.mxu0 0.0
    %104 = vmatpush2.msra.mxu0 0.0
    %105 = vmatprep.subr.mxu0 0.0
    %106 = vmatpush2.msra.mxu0 0.0
    %107 = vmatprep.subr.mxu0 0.0
    %108 = vmatpush2.msra.mxu0 0.0
    %109 = vmatprep.subr.mxu0 0.0
    %110 = vmatpush2.msra.mxu0 0.0
    %111 = vmatprep.subr.mxu0 0.0
    %112 = vmatpush2.msra.mxu0 0.0
    %113 = vmatprep.subr.mxu0 0.0
    %114 = vmatpush2.msra.mxu0 0.0
    %115 = vmatprep.subr.mxu0 0.0
    %116 = vmatpush2.msra.mxu0 0.0
    %117 = vmatprep.subr.mxu0 0.0
    %118 = vmatpush2.msra.mxu0 0.0
    %119 = vmatprep.subr.mxu0 0.0
    %120 = vmatpush2.msra.mxu0 0.0
    %121 = vmatprep.subr.mxu0 0.0
    %122 = vmatpush2.msra.mxu0 0.0
    %123 = vmatprep.subr.mxu0 0.0
    %124 = vmatpush2.msra.mxu0 0.0
    %125 = vmatprep.subr.mxu0 0.0
    %126 = vmatpush2.msra.mxu0 0.0
    %127 = vmatprep.subr.mxu0 0.0
    %128 = vmatpush2.msra.mxu0 0.0
    %129 = vmatprep.subr.mxu0 0.0
    %130 = vmatpush2.msra.mxu0 0.0
    %131 = vmatprep.mubr.f32.mxu0 0.0
    %132 = vmatmul.mubr.f32.gmra.mxu0 %v65
    %v133 = vpop.f32.mrf.mxu0
    %v134 = vadd.f32 %v61, %v133
    %v135 = vpop.f32.mrf.mxu0
    %136 = vdwg.mxu0
    %v137 = vmax.f32 %v134, 0.0
    %v138 = vld [vmem:[%s3] sm:$0xff]
    %v139 = vld [vmem:[%s3 + $0x8] sm:$0xff]
    %v140 = vld [vmem:[%s3 + $0x10] sm:$0xff]
    %v141 = vld [vmem:[%s3 + $0x18] sm:$0xff]
    %v142 = vld [vmem:[%s3 + $0x20] sm:$0xff]
    %v143 = vld [vmem:[%s3 + $0x28] sm:$0xff]
    %v144 = vld [vmem:[%s3 + $0x30] sm:$0xff]
    %v145 = vld [vmem:[%s3 + $0x38] sm:$0xff]
    %v146 = vld [vmem:[%s3 + $0x40] sm:$0xff]
    %v147 = vld [vmem:[%s3 + $0x48] sm:$0xff]
    %v148 = vld [vmem:[%s3 + $0x50] sm:$0xff]
    %v149 = vld [vmem:[%s3 + $0x58] sm:$0xff]
    %v150 = vld [vmem:[%s3 + $0x60] sm:$0xff]
    %v151 = vld [vmem:[%s3 + $0x68] sm:$0xff]
    %v152 = vld [vmem:[%s3 + $0x70] sm:$0xff]
    %v153 = vld [vmem:[%s3 + $0x78] sm:$0xff]
    %v154 = vld [vmem:[#allocation5] sm:$0x1]
    %v156 = vlaneseq
    %v157 = vshrl.u32 %v156, 7
    %v158 = vsub.s32 0, %v157
    %v159 = vrot.slane %v154, %v158
    %161 = vmatprep.subr.mxu0 0.0
    %162 = vmatpush1.msra.mxu0 %v153
    %163 = vmatprep.subr.mxu0 0.0
    %164 = vmatpush1.msra.mxu0 %v152
    %165 = vmatprep.subr.mxu0 0.0
    %166 = vmatpush1.msra.mxu0 %v151
    %167 = vmatprep.subr.mxu0 0.0
    %168 = vmatpush1.msra.mxu0 %v150
    %169 = vmatprep.subr.mxu0 0.0
    %170 = vmatpush1.msra.mxu0 %v149
    %171 = vmatprep.subr.mxu0 0.0
    %172 = vmatpush1.msra.mxu0 %v148
    %173 = vmatprep.subr.mxu0 0.0
    %174 = vmatpush1.msra.mxu0 %v147
    %175 = vmatprep.subr.mxu0 0.0
    %176 = vmatpush1.msra.mxu0 %v146
    %177 = vmatprep.subr.mxu0 0.0
    %178 = vmatpush1.msra.mxu0 %v145
    %179 = vmatprep.subr.mxu0 0.0
    %180 = vmatpush1.msra.mxu0 %v144
    %181 = vmatprep.subr.mxu0 0.0
    %182 = vmatpush1.msra.mxu0 %v143
    %183 = vmatprep.subr.mxu0 0.0
    %184 = vmatpush1.msra.mxu0 %v142
    %185 = vmatprep.subr.mxu0 0.0
    %186 = vmatpush1.msra.mxu0 %v141
    %187 = vmatprep.subr.mxu0 0.0
    %188 = vmatpush1.msra.mxu0 %v140
    %189 = vmatprep.subr.mxu0 0.0
    %190 = vmatpush1.msra.mxu0 %v139
    %191 = vmatprep.subr.mxu0 0.0
    %192 = vmatpush1.msra.mxu0 %v138
    %193 = vmatprep.subr.mxu0 0.0
    %194 = vmatpush2.msra.mxu0 0.0
    %195 = vmatprep.subr.mxu0 0.0
    %196 = vmatpush2.msra.mxu0 0.0
    %197 = vmatprep.subr.mxu0 0.0
    %198 = vmatpush2.msra.mxu0 0.0
    %199 = vmatprep.subr.mxu0 0.0
    %200 = vmatpush2.msra.mxu0 0.0
    %201 = vmatprep.subr.mxu0 0.0
    %202 = vmatpush2.msra.mxu0 0.0
    %203 = vmatprep.subr.mxu0 0.0
    %204 = vmatpush2.msra.mxu0 0.0
    %205 = vmatprep.subr.mxu0 0.0
    %206 = vmatpush2.msra.mxu0 0.0
    %207 = vmatprep.subr.mxu0 0.0
    %208 = vmatpush2.msra.mxu0 0.0
    %209 = vmatprep.subr.mxu0 0.0
    %210 = vmatpush2.msra.mxu0 0.0
    %211 = vmatprep.subr.mxu0 0.0
    %212 = vmatpush2.msra.mxu0 0.0
    %213 = vmatprep.subr.mxu0 0.0
    %214 = vmatpush2.msra.mxu0 0.0
    %215 = vmatprep.subr.mxu0 0.0
    %216 = vmatpush2.msra.mxu0 0.0
    %217 = vmatprep.subr.mxu0 0.0
    %218 = vmatpush2.msra.mxu0 0.0
    %219 = vmatprep.subr.mxu0 0.0
    %220 = vmatpush2.msra.mxu0 0.0
    %221 = vmatprep.subr.mxu0 0.0
    %222 = vmatpush2.msra.mxu0 0.0
    %223 = vmatprep.subr.mxu0 0.0
    %224 = vmatpush2.msra.mxu0 0.0
    %225 = vmatprep.mubr.f32.mxu0 0.0
    %226 = vmatmul.mubr.f32.gmra.mxu0 %v137
    %v227 = vpop.f32.mrf.mxu0
    %v228 = vadd.f32 %v159, %v227
    %v229 = vpop.f32.mrf.mxu0
    %230 = vdwg.mxu0
    %v231 = vmax.f32 %v228, 0.0
    %v232 = vld [vmem:[%s5] sm:$0xff]
    %v233 = vld [vmem:[%s5 + $0x8] sm:$0xff]
    %v234 = vld [vmem:[%s5 + $0x10] sm:$0xff]
    %v235 = vld [vmem:[%s5 + $0x18] sm:$0xff]
    %v236 = vld [vmem:[%s5 + $0x20] sm:$0xff]
    %v237 = vld [vmem:[%s5 + $0x28] sm:$0xff]
    %v238 = vld [vmem:[%s5 + $0x30] sm:$0xff]
    %v239 = vld [vmem:[%s5 + $0x38] sm:$0xff]
    %v240 = vld [vmem:[%s5 + $0x40] sm:$0xff]
    %v241 = vld [vmem:[%s5 + $0x48] sm:$0xff]
    %v242 = vld [vmem:[%s5 + $0x50] sm:$0xff]
    %v243 = vld [vmem:[%s5 + $0x58] sm:$0xff]
    %v244 = vld [vmem:[%s5 + $0x60] sm:$0xff]
    %v245 = vld [vmem:[%s5 + $0x68] sm:$0xff]
    %v246 = vld [vmem:[%s5 + $0x70] sm:$0xff]
    %v247 = vld [vmem:[%s5 + $0x78] sm:$0xff]
    %v248 = vld [vmem:[%s6] sm:$0x1]
    %v250 = vlaneseq
    %v251 = vshrl.u32 %v250, 7
    %v252 = vsub.s32 0, %v251
    %v253 = vrot.slane %v248, %v252
    %255 = vmatprep.subr.mxu0 0.0
    %256 = vmatpush1.msra.mxu0 %v247
    %257 = vmatprep.subr.mxu0 0.0
    %258 = vmatpush1.msra.mxu0 %v246
    %259 = vmatprep.subr.mxu0 0.0
    %260 = vmatpush1.msra.mxu0 %v245
    %261 = vmatprep.subr.mxu0 0.0
    %262 = vmatpush1.msra.mxu0 %v244
    %263 = vmatprep.subr.mxu0 0.0
    %264 = vmatpush1.msra.mxu0 %v243
    %265 = vmatprep.subr.mxu0 0.0
    %266 = vmatpush1.msra.mxu0 %v242
    %267 = vmatprep.subr.mxu0 0.0
    %268 = vmatpush1.msra.mxu0 %v241
    %269 = vmatprep.subr.mxu0 0.0
    %270 = vmatpush1.msra.mxu0 %v240
    %271 = vmatprep.subr.mxu0 0.0
    %272 = vmatpush1.msra.mxu0 %v239
    %273 = vmatprep.subr.mxu0 0.0
    %274 = vmatpush1.msra.mxu0 %v238
    %275 = vmatprep.subr.mxu0 0.0
    %276 = vmatpush1.msra.mxu0 %v237
    %277 = vmatprep.subr.mxu0 0.0
    %278 = vmatpush1.msra.mxu0 %v236
    %279 = vmatprep.subr.mxu0 0.0
    %280 = vmatpush1.msra.mxu0 %v235
    %281 = vmatprep.subr.mxu0 0.0
    %282 = vmatpush1.msra.mxu0 %v234
    %283 = vmatprep.subr.mxu0 0.0
    %284 = vmatpush1.msra.mxu0 %v233
    %285 = vmatprep.subr.mxu0 0.0
    %286 = vmatpush1.msra.mxu0 %v232
    %287 = vmatprep.subr.mxu0 0.0
    %288 = vmatpush2.msra.mxu0 0.0
    %289 = vmatprep.subr.mxu0 0.0
    %290 = vmatpush2.msra.mxu0 0.0
    %291 = vmatprep.subr.mxu0 0.0
    %292 = vmatpush2.msra.mxu0 0.0
    %293 = vmatprep.subr.mxu0 0.0
    %294 = vmatpush2.msra.mxu0 0.0
    %295 = vmatprep.subr.mxu0 0.0
    %296 = vmatpush2.msra.mxu0 0.0
    %297 = vmatprep.subr.mxu0 0.0
    %298 = vmatpush2.msra.mxu0 0.0
    %299 = vmatprep.subr.mxu0 0.0
    %300 = vmatpush2.msra.mxu0 0.0
    %301 = vmatprep.subr.mxu0 0.0
    %302 = vmatpush2.msra.mxu0 0.0
    %303 = vmatprep.subr.mxu0 0.0
    %304 = vmatpush2.msra.mxu0 0.0
    %305 = vmatprep.subr.mxu0 0.0
    %306 = vmatpush2.msra.mxu0 0.0
    %307 = vmatprep.subr.mxu0 0.0
    %308 = vmatpush2.msra.mxu0 0.0
    %309 = vmatprep.subr.mxu0 0.0
    %310 = vmatpush2.msra.mxu0 0.0
    %311 = vmatprep.subr.mxu0 0.0
    %312 = vmatpush2.msra.mxu0 0.0
    %313 = vmatprep.subr.mxu0 0.0
    %314 = vmatpush2.msra.mxu0 0.0
    %315 = vmatprep.subr.mxu0 0.0
    %316 = vmatpush2.msra.mxu0 0.0
    %317 = vmatprep.subr.mxu0 0.0
    %318 = vmatpush2.msra.mxu0 0.0
    %319 = vmatprep.mubr.f32.mxu0 0.0
    %320 = vmatmul.mubr.f32.gmra.mxu0 %v231
    %v321 = vpop.f32.mrf.mxu0
    %v322 = vadd.f32 %v253, %v321
    %v323 = vpop.f32.mrf.mxu0
    %324 = vdwg.mxu0
    %v325 = vtanh.pop %v322
    %v326 = vmul.f32 %v325, 2.0
    %vm327 = vcmask 64512
    %328 = vst.msk [vmem:[#allocation7] sm:$0xff] %vm327, %v326
    // Predicated region
    $region38: #{tpu_custom_call.1} parent=1 // pred_check
      _
    $region39: #{tpu_custom_call.1} parent=1 // pred_check_branch
      %330 = sbr.rel (0) target = $region41
    $region40: #{tpu_custom_call.1} parent=1 // pred_region
      %s332 = ssub.s32 128, 128
      %333 = vsyncadd [#allocation4], %s332
      %s335 = sshll.u32 [#allocation7], 4
      %s336 = int_to_ptr.vmem [resolvable:$true] %s335
      %338 = dma.vmem_to_hbm [thread:$0]  %s336, 128, %s7, [#allocation4]
    $region41: #{tpu_custom_call.1} parent=1 // pred_fallthru
      _
    // Predicated region
    $region42: #{tpu_custom_call.1} parent=1 // pred_check
      _
    $region43: #{tpu_custom_call.1} parent=1 // pred_check_branch
      %340 = sbr.rel (0) target = $region45
    $region44: #{tpu_custom_call.1} parent=1 // pred_region
      %341 = dma.done [#allocation4], 128
    $region45: #{tpu_custom_call.1} parent=1 // pred_fallthru
      _
    %342 = vsyncpa [#allocation3], 1
    %343 = vsyncpa [#allocation6], 1
    %344 = vsyncpa [#allocation4], 1

</llo_original>
